<compile_context>
chip_gen: v6e
topology: v6e:2x2x1
jax: 0.10.0
libtpu: 0.0.40
codegen_flags: <defaults>
</compile_context>

<pallas_src>
from functools import partial

import jax
import jax.numpy as jnp
from jax.experimental import pallas as pl
from jax.experimental.pallas import tpu as pltpu

EPS = 1e-5


# ----------------------------------------------------------------------------- kernel
def mlp_kernel(
    x_ref,
    w1_ref, b1_ref,
    w2_ref, b2_ref,
    w3_ref, b3_ref,
    w4_ref, b4_ref,
    w5_ref, b5_ref,      # w5 is a (1, 32) row, b5 is (1, 1)
    out_ref,             # (1, TILE_B) lane-dense
):
    # BN is already folded into (w, b) for layers 1-3; Dropout = identity (eval).
    h = x_ref[...].astype(jnp.bfloat16)

    h = jnp.maximum(
        jnp.dot(h, w1_ref[...], preferred_element_type=jnp.float32) + b1_ref[...], 0.0)
    h = h.astype(jnp.bfloat16)

    h = jnp.maximum(
        jnp.dot(h, w2_ref[...], preferred_element_type=jnp.float32) + b2_ref[...], 0.0)
    h = h.astype(jnp.bfloat16)

    h = jnp.maximum(
        jnp.dot(h, w3_ref[...], preferred_element_type=jnp.float32) + b3_ref[...], 0.0)
    h = h.astype(jnp.bfloat16)

    # fc4 output stays f32 (no further MXU use).
    h = jnp.maximum(
        jnp.dot(h, w4_ref[...], preferred_element_type=jnp.float32) + b4_ref[...], 0.0)

    # fc5 (N=1) OFF the MXU: VPU multiply + cross-lane reduction (XLU), then a
    # lane-dense store.  y: (TILE_B,) -> (1, TILE_B).
    y = jnp.sum(h * w5_ref[...], axis=-1)
    out_ref[...] = (y.reshape(1, -1) + b5_ref[...]).astype(out_ref.dtype)


# ----------------------------------------------------------------------------- param fusion (call ONCE)
def fuse_params(params):
    """Fold eval-mode BatchNorm into the preceding Linear; cast matmul weights to
    bf16; lay fc5 out as a (1, 32) row for the VPU path.  Call once, reuse."""
    fused = {}
    for li in (1, 2, 3):
        scale = params[f"g{li}"] * jax.lax.rsqrt(params[f"v{li}"] + EPS)   # (1, C)
        fused[f"w{li}"] = (params[f"w{li}"] * scale).astype(jnp.bfloat16)  # (din, C)
        fused[f"b{li}"] = ((params[f"b{li}"] - params[f"m{li}"]) * scale
                           + params[f"be{li}"]).astype(jnp.float32)
    fused["w4"] = params["w4"].astype(jnp.bfloat16)
    fused["b4"] = params["b4"].astype(jnp.float32)
    fused["w5"] = params["w5"].reshape(1, -1).astype(jnp.float32)          # (1, 32) row
    fused["b5"] = params["b5"].reshape(1, 1).astype(jnp.float32)           # (1, 1)
    return fused


# ----------------------------------------------------------------------------- wrapper
def _round_up(x, m):
    return ((x + m - 1) // m) * m


@partial(jax.jit, static_argnames=("tile_b", "small_b_threshold"))
def tree_memory_predictor_forward(x, fused, *, tile_b=None, small_b_threshold=256):
    """x: (B, input_dim) float32 or bfloat16 -> (B,) float32 (matches x.squeeze())."""
    B, D = x.shape
    w_args = (
        fused["w1"], fused["b1"],
        fused["w2"], fused["b2"],
        fused["w3"], fused["b3"],
        fused["w4"], fused["b4"],
        fused["w5"], fused["b5"],
    )

    if B < small_b_threshold:
        # Tiny batch: single fused block, no grid (pure launch/DMA overhead regime).
        out = pl.pallas_call(
            mlp_kernel,
            out_shape=jax.ShapeDtypeStruct((1, B), jnp.float32),
            in_specs=[pl.BlockSpec(memory_space=pltpu.MemorySpace.VMEM)]
                     * (1 + len(w_args)),
            out_specs=pl.BlockSpec(memory_space=pltpu.MemorySpace.VMEM),
        )(x, *w_args)
        return out.reshape(B)

    if tile_b is None:
        # >= 2 grid steps when possible (v7x megacore), 128-aligned, capped at 2048.
        tile_b = max(128, min(2048, _round_up(pl.cdiv(B, 2), 128)))
    num_tiles = pl.cdiv(B, tile_b)

    def weight_spec(a):
        # Full array as one block, same block every grid step -> resident in VMEM.
        return pl.BlockSpec(a.shape, lambda i: (0,) * a.ndim)

    # No wrapper-side pad: the ragged last input block is masked by Pallas; the
    # output slab (num_tiles, tile_b) divides evenly, garbage rows are sliced off.
    out = pl.pallas_call(
        mlp_kernel,
        out_shape=jax.ShapeDtypeStruct((num_tiles, tile_b), jnp.float32),
        grid=(num_tiles,),
        in_specs=[pl.BlockSpec((tile_b, D), lambda i: (i, 0))]
                 + [weight_spec(a) for a in w_args],
        out_specs=pl.BlockSpec((1, tile_b), lambda i: (i, 0)),
        compiler_params=pltpu.CompilerParams(
            dimension_semantics=("parallel",)),
    )(x, *w_args)
    return out.reshape(-1)[:B]


# ----------------------------------------------------------------------------- params / refs
def init_params(key, input_dim):
    """PyTorch-style init: Linear U(-1/sqrt(fan_in), 1/sqrt(fan_in)), BN defaults."""
    dims = [input_dim, 256, 128, 64, 32, 1]
    params = {}
    keys = jax.random.split(key, 10)
    ki = 0
    for li, (din, dout) in enumerate(zip(dims[:-1], dims[1:]), start=1):
        bound = 1.0 / jnp.sqrt(jnp.float32(din))
        params[f"w{li}"] = jax.random.uniform(
            keys[ki], (din, dout), jnp.float32, -bound, bound)
        ki += 1
        params[f"b{li}"] = jax.random.uniform(
            keys[ki], (1, dout), jnp.float32, -bound, bound)
        ki += 1
    # BatchNorm parameters for layers 1..3 (gamma=1, beta=0, mean=0, var=1).
    for li, c in zip([1, 2, 3], [256, 128, 64]):
        params[f"g{li}"] = jnp.ones((1, c), jnp.float32)
        params[f"be{li}"] = jnp.zeros((1, c), jnp.float32)
        params[f"m{li}"] = jnp.zeros((1, c), jnp.float32)
        params[f"v{li}"] = jnp.ones((1, c), jnp.float32)
    return params


def _bn(h, gamma, beta, mean, var):
    inv_std = jax.lax.rsqrt(var + EPS)
    return (h - mean) * (gamma * inv_std) + beta


def ref_f32(x, p):
    """Plain-JAX f32 reference with explicit eval-mode BN (matches PyTorch)."""
    h = jnp.maximum(_bn(x @ p["w1"] + p["b1"], p["g1"], p["be1"], p["m1"], p["v1"]), 0.0)
    h = jnp.maximum(_bn(h @ p["w2"] + p["b2"], p["g2"], p["be2"], p["m2"], p["v2"]), 0.0)
    h = jnp.maximum(_bn(h @ p["w3"] + p["b3"], p["g3"], p["be3"], p["m3"], p["v3"]), 0.0)
    h = jnp.maximum(h @ p["w4"] + p["b4"], 0.0)
    return (h @ p["w5"] + p["b5"]).reshape(-1)


def ref_mixed(x, fused):
    """Plain-JAX reference with the same bf16/f32 arithmetic as the kernel."""
    h = x.astype(jnp.bfloat16)
    for li in (1, 2, 3):
        h = jnp.maximum(
            jnp.dot(h, fused[f"w{li}"], preferred_element_type=jnp.float32)
            + fused[f"b{li}"], 0.0).astype(jnp.bfloat16)
    h = jnp.maximum(
        jnp.dot(h, fused["w4"], preferred_element_type=jnp.float32)
        + fused["b4"], 0.0)
    return jnp.sum(h * fused["w5"], axis=-1) + fused["b5"][0, 0]


# ----------------------------------------------------------------------------- main
if __name__ == "__main__":
    key = jax.random.PRNGKey(0)
    k_param, k_x1, k_x2 = jax.random.split(key, 3)

    B, INPUT_DIM = 8, 16
    params = init_params(k_param, INPUT_DIM)
    fused = fuse_params(params)   # hoisted: computed once, reused for every call

    # 1) Small-batch (single-block) path.
    x = jax.random.normal(k_x1, (B, INPUT_DIM), jnp.float32)
    y = tree_memory_predictor_forward(x, fused)
    jax.block_until_ready(y)
    assert y.shape == (B,)
    assert jnp.allclose(y, ref_mixed(x, fused), atol=1e-3, rtol=1e-3)
    # Loose check against the f32 PyTorch-equivalent reference (bf16 matmuls).
    assert jnp.allclose(y, ref_f32(x, params), atol=5e-2, rtol=5e-2)

    # 2) Tiled/grid path, explicit tile_b: ragged batch, no wrapper pad
    #    (3 tiles of 128 covering 300 rows; last block read is masked by Pallas).
    B2 = 300
    x2 = jax.random.normal(k_x2, (B2, INPUT_DIM), jnp.float32)
    y2 = tree_memory_predictor_forward(x2, fused, tile_b=128, small_b_threshold=0)
    jax.block_until_ready(y2)
    assert y2.shape == (B2,)
    assert jnp.allclose(y2, ref_mixed(x2, fused), atol=1e-3, rtol=1e-3)
    assert jnp.allclose(y2, ref_f32(x2, params), atol=5e-2, rtol=5e-2)

    # 3) Auto tile selection (>= 2 tiles so both v7x TensorCores are used).
    y3 = tree_memory_predictor_forward(x2, fused, small_b_threshold=0)
    jax.block_until_ready(y3)
    assert y3.shape == (B2,)
    assert jnp.allclose(y3, ref_mixed(x2, fused), atol=1e-3, rtol=1e-3)

    print("KERNEL_OK")
</pallas_src>

<mosaic_0001>
module attributes {stable_mosaic.version = 11 : i64} {
  func.func @mlp_kernel(%arg0: memref<8x16xf32, #tpu.memory_space<vmem>>, %arg1: memref<16x256xbf16, #tpu.memory_space<vmem>>, %arg2: memref<1x256xf32, #tpu.memory_space<vmem>>, %arg3: memref<256x128xbf16, #tpu.memory_space<vmem>>, %arg4: memref<1x128xf32, #tpu.memory_space<vmem>>, %arg5: memref<128x64xbf16, #tpu.memory_space<vmem>>, %arg6: memref<1x64xf32, #tpu.memory_space<vmem>>, %arg7: memref<64x32xbf16, #tpu.memory_space<vmem>>, %arg8: memref<1x32xf32, #tpu.memory_space<vmem>>, %arg9: memref<1x32xf32, #tpu.memory_space<vmem>>, %arg10: memref<1x1xf32, #tpu.memory_space<vmem>>, %arg11: memref<1x8xf32, #tpu.memory_space<vmem>>) attributes {dimension_semantics = [], scalar_prefetch = 0 : i64, scratch_operands = 0 : i64, tpu.core_type = #tpu.core_type<tc>} {
    %c0 = arith.constant 0 : index
    %c0_0 = arith.constant 0 : index
    %0 = vector.load %arg0[%c0, %c0_0] : memref<8x16xf32, #tpu.memory_space<vmem>>, vector<8x16xf32>
    %1 = arith.truncf %0 : vector<8x16xf32> to vector<8x16xbf16>
    %c0_1 = arith.constant 0 : index
    %c0_2 = arith.constant 0 : index
    %2 = vector.load %arg1[%c0_1, %c0_2] : memref<16x256xbf16, #tpu.memory_space<vmem>>, vector<16x256xbf16>
    %cst = arith.constant dense<0.000000e+00> : vector<8x256xf32>
    %3 = tpu.matmul %1, %2, %cst {dimension_numbers = #tpu.dot_dimension_numbers<[1], [0], [0], [1], [0, 0, 1, 1], [], []>} : vector<8x16xbf16>, vector<16x256xbf16>, vector<8x256xf32> -> vector<8x256xf32>
    %c0_3 = arith.constant 0 : index
    %c0_4 = arith.constant 0 : index
    %4 = vector.load %arg2[%c0_3, %c0_4] : memref<1x256xf32, #tpu.memory_space<vmem>>, vector<1x256xf32>
    %5 = vector.broadcast %4 : vector<1x256xf32> to vector<8x256xf32>
    %6 = arith.addf %3, %5 : vector<8x256xf32>
    %cst_5 = arith.constant 0.000000e+00 : f32
    %7 = vector.broadcast %cst_5 : f32 to vector<8x256xf32>
    %8 = arith.maximumf %6, %7 : vector<8x256xf32>
    %9 = arith.truncf %8 : vector<8x256xf32> to vector<8x256xbf16>
    %c0_6 = arith.constant 0 : index
    %c0_7 = arith.constant 0 : index
    %10 = vector.load %arg3[%c0_6, %c0_7] : memref<256x128xbf16, #tpu.memory_space<vmem>>, vector<256x128xbf16>
    %cst_8 = arith.constant dense<0.000000e+00> : vector<8x128xf32>
    %11 = tpu.matmul %9, %10, %cst_8 {dimension_numbers = #tpu.dot_dimension_numbers<[1], [0], [0], [1], [0, 0, 1, 1], [], []>} : vector<8x256xbf16>, vector<256x128xbf16>, vector<8x128xf32> -> vector<8x128xf32>
    %c0_9 = arith.constant 0 : index
    %c0_10 = arith.constant 0 : index
    %12 = vector.load %arg4[%c0_9, %c0_10] : memref<1x128xf32, #tpu.memory_space<vmem>>, vector<1x128xf32>
    %13 = vector.broadcast %12 : vector<1x128xf32> to vector<8x128xf32>
    %14 = arith.addf %11, %13 : vector<8x128xf32>
    %cst_11 = arith.constant 0.000000e+00 : f32
    %15 = vector.broadcast %cst_11 : f32 to vector<8x128xf32>
    %16 = arith.maximumf %14, %15 : vector<8x128xf32>
    %17 = arith.truncf %16 : vector<8x128xf32> to vector<8x128xbf16>
    %c0_12 = arith.constant 0 : index
    %c0_13 = arith.constant 0 : index
    %18 = vector.load %arg5[%c0_12, %c0_13] : memref<128x64xbf16, #tpu.memory_space<vmem>>, vector<128x64xbf16>
    %cst_14 = arith.constant dense<0.000000e+00> : vector<8x64xf32>
    %19 = tpu.matmul %17, %18, %cst_14 {dimension_numbers = #tpu.dot_dimension_numbers<[1], [0], [0], [1], [0, 0, 1, 1], [], []>} : vector<8x128xbf16>, vector<128x64xbf16>, vector<8x64xf32> -> vector<8x64xf32>
    %c0_15 = arith.constant 0 : index
    %c0_16 = arith.constant 0 : index
    %20 = vector.load %arg6[%c0_15, %c0_16] : memref<1x64xf32, #tpu.memory_space<vmem>>, vector<1x64xf32>
    %21 = vector.broadcast %20 : vector<1x64xf32> to vector<8x64xf32>
    %22 = arith.addf %19, %21 : vector<8x64xf32>
    %cst_17 = arith.constant 0.000000e+00 : f32
    %23 = vector.broadcast %cst_17 : f32 to vector<8x64xf32>
    %24 = arith.maximumf %22, %23 : vector<8x64xf32>
    %25 = arith.truncf %24 : vector<8x64xf32> to vector<8x64xbf16>
    %c0_18 = arith.constant 0 : index
    %c0_19 = arith.constant 0 : index
    %26 = vector.load %arg7[%c0_18, %c0_19] : memref<64x32xbf16, #tpu.memory_space<vmem>>, vector<64x32xbf16>
    %cst_20 = arith.constant dense<0.000000e+00> : vector<8x32xf32>
    %27 = tpu.matmul %25, %26, %cst_20 {dimension_numbers = #tpu.dot_dimension_numbers<[1], [0], [0], [1], [0, 0, 1, 1], [], []>} : vector<8x64xbf16>, vector<64x32xbf16>, vector<8x32xf32> -> vector<8x32xf32>
    %c0_21 = arith.constant 0 : index
    %c0_22 = arith.constant 0 : index
    %28 = vector.load %arg8[%c0_21, %c0_22] : memref<1x32xf32, #tpu.memory_space<vmem>>, vector<1x32xf32>
    %29 = vector.broadcast %28 : vector<1x32xf32> to vector<8x32xf32>
    %30 = arith.addf %27, %29 : vector<8x32xf32>
    %cst_23 = arith.constant 0.000000e+00 : f32
    %31 = vector.broadcast %cst_23 : f32 to vector<8x32xf32>
    %32 = arith.maximumf %30, %31 : vector<8x32xf32>
    %c0_24 = arith.constant 0 : index
    %c0_25 = arith.constant 0 : index
    %33 = vector.load %arg9[%c0_24, %c0_25] : memref<1x32xf32, #tpu.memory_space<vmem>>, vector<1x32xf32>
    %34 = vector.broadcast %33 : vector<1x32xf32> to vector<8x32xf32>
    %35 = arith.mulf %32, %34 : vector<8x32xf32>
    %cst_26 = arith.constant dense<0.000000e+00> : vector<8xf32>
    %36 = vector.multi_reduction <add>, %35, %cst_26 [1] : vector<8x32xf32> to vector<8xf32>
    %37 = vector.shape_cast %36 : vector<8xf32> to vector<1x8xf32>
    %c0_27 = arith.constant 0 : index
    %c0_28 = arith.constant 0 : index
    %38 = vector.load %arg10[%c0_27, %c0_28] : memref<1x1xf32, #tpu.memory_space<vmem>>, vector<1x1xf32>
    %39 = vector.broadcast %38 : vector<1x1xf32> to vector<1x8xf32>
    %40 = arith.addf %37, %39 : vector<1x8xf32>
    %c0_29 = arith.constant 0 : index
    %c0_30 = arith.constant 0 : index
    %41 = vector.load %arg11[%c0_29, %c0_30] : memref<1x8xf32, #tpu.memory_space<vmem>>, vector<1x8xf32>
    tpu.vector_store %arg11[%c0_29, %c0_30], %40 {strides = array<i32>} : memref<1x8xf32, #tpu.memory_space<vmem>>, vector<1x8xf32>,
    return
  }
}

</mosaic_0001>

<llo_original>
// kernel: tree_memory_predictor_forward.1
$region0: #{tree_memory_predictor_forward.1}
  #allocation0 [shape = 'u32[]', space=smem, size = 0x4, offset = 0x4, fixed_abs, tag = 'smem constant byte address 0x4 - core index']
  #allocation1 [shape = 'u32[144,128]{1,0:T(1,128)}', space=vmem, size = 0x12000, scoped, tag = 'internal scratch']
  #allocation2 [shape = 'f32[1,1]{1,0:T(1,128)S(1)}', space=vmem, size = 0x200, scoped, tag = 'scoped memory for tree_memory_predictor_forward.1']
  %s0 = inlined_call_operand.hbm [shape: f32[8,16], index: 0, kind: input, shape index: {}]
  %s1 = inlined_call_operand.vmem [shape: bf16[16,256], index: 1, kind: input, shape index: {}]
  %s2 = inlined_call_operand.hbm [shape: f32[1,256], index: 2, kind: input, shape index: {}]
  %s3 = inlined_call_operand.vmem [shape: bf16[256,128], index: 3, kind: input, shape index: {}]
  %s4 = inlined_call_operand.hbm [shape: f32[1,128], index: 4, kind: input, shape index: {}]
  %s5 = inlined_call_operand.vmem [shape: bf16[128,64], index: 5, kind: input, shape index: {}]
  %s6 = inlined_call_operand.hbm [shape: f32[1,64], index: 6, kind: input, shape index: {}]
  %s7 = inlined_call_operand.vmem [shape: bf16[64,32], index: 7, kind: input, shape index: {}]
  %s8 = inlined_call_operand.hbm [shape: f32[1,32], index: 8, kind: input, shape index: {}]
  %s9 = inlined_call_operand.vmem [shape: f32[1,32], index: 9, kind: input, shape index: {}]
  %s10 = inlined_call_operand.<no memory space> [shape: f32[1,1], index: 10, kind: input, shape index: {}]
  %s11 = inlined_call_operand.hbm [shape: f32[1,8], index: 11, kind: output, shape index: {}]
  %s12 = sld [smem:[#allocation0]]
  $region74: #{tree_memory_predictor_forward.1} parent=0
    _
  %s14 = ssub.s32 1, %s12
  %s15 = scalar_select 0, %s14, %s12
  %v16 = vstv %s10
  %17 = vst [vmem:[#allocation2] sm:$0x1] %v16
  $region1: #{tree_memory_predictor_forward.1} parent=0
    #allocation3 [shape = 'u8[4096]{0}', space=vmem, size = 0x1000, scoped, tag = 'input window, operand 0, single buffered']
    #allocation4 [shape = 's32[1]{0}', space=sflag, size = 0x4, scoped, tag = 'scoped memory for tree_memory_predictor_forward.1']
    #allocation5 [shape = 's32[1]{0}', space=sflag, size = 0x4, scoped, tag = 'scoped memory for tree_memory_predictor_forward.1']
    #allocation6 [shape = 'u8[1024]{0}', space=vmem, size = 0x400, scoped, tag = 'input window, operand 2, single buffered']
    #allocation7 [shape = 's32[1]{0}', space=sflag, size = 0x4, scoped, tag = 'scoped memory for tree_memory_predictor_forward.1']
    #allocation8 [shape = 'u8[512]{0}', space=vmem, size = 0x400, scoped, tag = 'input window, operand 4, single buffered']
    #allocation9 [shape = 'u8[512]{0}', space=vmem, size = 0x400, scoped, tag = 'input window, operand 6, single buffered']
    #allocation10 [shape = 's32[1]{0}', space=sflag, size = 0x4, scoped, tag = 'scoped memory for tree_memory_predictor_forward.1']
    #allocation11 [shape = 'u8[512]{0}', space=vmem, size = 0x400, scoped, tag = 'input window, operand 8, single buffered']
    #allocation12 [shape = 'u8[512]{0}', space=vmem, size = 0x400, scoped, tag = 'output window, operand 0, single buffered']
    %18 = vsyncpa [#allocation4], 0
    %19 = vsyncpa [#allocation7], 0
    %20 = vsyncpa [#allocation10], 0
    %21 = vsyncpa [#allocation5], 0
    // Predicated region
    $region2: #{tree_memory_predictor_forward.1} parent=1 // pred_check
      _
    $region3: #{tree_memory_predictor_forward.1} parent=1 // pred_check_branch
      %23 = sbr.rel (0) target = $region5
    $region4: #{tree_memory_predictor_forward.1} parent=1 // pred_region
      %s25 = ssub.s32 128, 128
      %26 = vsyncadd [#allocation4], %s25
      %s28 = sshll.u32 [#allocation3], 4
      %s29 = int_to_ptr.vmem [resolvable:$true] %s28
      %31 = dma.hbm_to_vmem [thread:$0]  %s0, 128, %s29, [#allocation4]
    $region5: #{tree_memory_predictor_forward.1} parent=1 // pred_fallthru
      _
    // Predicated region
    $region6: #{tree_memory_predictor_forward.1} parent=1 // pred_check
      _
    $region7: #{tree_memory_predictor_forward.1} parent=1 // pred_check_branch
      %33 = sbr.rel (0) target = $region9
    $region8: #{tree_memory_predictor_forward.1} parent=1 // pred_region
      _
    $region9: #{tree_memory_predictor_forward.1} parent=1 // pred_fallthru
      _
    // Predicated region
    $region10: #{tree_memory_predictor_forward.1} parent=1 // pred_check
      _
    $region11: #{tree_memory_predictor_forward.1} parent=1 // pred_check_branch
      %35 = sbr.rel (0) target = $region13
    $region12: #{tree_memory_predictor_forward.1} parent=1 // pred_region
      %s37 = ssub.s32 32, 32
      %38 = vsyncadd [#allocation7], %s37
      %s40 = sshll.u32 [#allocation6], 4
      %s41 = int_to_ptr.vmem [resolvable:$true] %s40
      %43 = dma.hbm_to_vmem [thread:$0]  %s2, 32, %s41, [#allocation7]
    $region13: #{tree_memory_predictor_forward.1} parent=1 // pred_fallthru
      _
    // Predicated region
    $region14: #{tree_memory_predictor_forward.1} parent=1 // pred_check
      _
    $region15: #{tree_memory_predictor_forward.1} parent=1 // pred_check_branch
      %45 = sbr.rel (0) target = $region17
    $region16: #{tree_memory_predictor_forward.1} parent=1 // pred_region
      _
    $region17: #{tree_memory_predictor_forward.1} parent=1 // pred_fallthru
      _
    // Predicated region
    $region18: #{tree_memory_predictor_forward.1} parent=1 // pred_check
      _
    $region19: #{tree_memory_predictor_forward.1} parent=1 // pred_check_branch
      %47 = sbr.rel (0) target = $region21
    $region20: #{tree_memory_predictor_forward.1} parent=1 // pred_region
      %s49 = ssub.s32 16, 16
      %50 = vsyncadd [#allocation7], %s49
      %s52 = sshll.u32 [#allocation8], 4
      %s53 = int_to_ptr.vmem [resolvable:$true] %s52
      %55 = dma.hbm_to_vmem [thread:$0]  %s4, 16, %s53, [#allocation7]
    $region21: #{tree_memory_predictor_forward.1} parent=1 // pred_fallthru
      _
    // Predicated region
    $region22: #{tree_memory_predictor_forward.1} parent=1 // pred_check
      _
    $region23: #{tree_memory_predictor_forward.1} parent=1 // pred_check_branch
      %57 = sbr.rel (0) target = $region25
    $region24: #{tree_memory_predictor_forward.1} parent=1 // pred_region
      _
    $region25: #{tree_memory_predictor_forward.1} parent=1 // pred_fallthru
      _
    // Predicated region
    $region26: #{tree_memory_predictor_forward.1} parent=1 // pred_check
      _
    $region27: #{tree_memory_predictor_forward.1} parent=1 // pred_check_branch
      %59 = sbr.rel (0) target = $region29
    $region28: #{tree_memory_predictor_forward.1} parent=1 // pred_region
      %s61 = ssub.s32 16, 16
      %62 = vsyncadd [#allocation10], %s61
      %s64 = sshll.u32 [#allocation9], 4
      %s65 = int_to_ptr.vmem [resolvable:$true] %s64
      %67 = dma.hbm_to_vmem [thread:$0]  %s6, 16, %s65, [#allocation10]
    $region29: #{tree_memory_predictor_forward.1} parent=1 // pred_fallthru
      _
    // Predicated region
    $region30: #{tree_memory_predictor_forward.1} parent=1 // pred_check
      _
    $region31: #{tree_memory_predictor_forward.1} parent=1 // pred_check_branch
      %69 = sbr.rel (0) target = $region33
    $region32: #{tree_memory_predictor_forward.1} parent=1 // pred_region
      _
    $region33: #{tree_memory_predictor_forward.1} parent=1 // pred_fallthru
      _
    // Predicated region
    $region34: #{tree_memory_predictor_forward.1} parent=1 // pred_check
      _
    $region35: #{tree_memory_predictor_forward.1} parent=1 // pred_check_branch
      %71 = sbr.rel (0) target = $region37
    $region36: #{tree_memory_predictor_forward.1} parent=1 // pred_region
      %s73 = ssub.s32 16, 16
      %74 = vsyncadd [#allocation10], %s73
      %s76 = sshll.u32 [#allocation11], 4
      %s77 = int_to_ptr.vmem [resolvable:$true] %s76
      %79 = dma.hbm_to_vmem [thread:$0]  %s8, 16, %s77, [#allocation10]
    $region37: #{tree_memory_predictor_forward.1} parent=1 // pred_fallthru
      _
    // Predicated region
    $region38: #{tree_memory_predictor_forward.1} parent=1 // pred_check
      _
    $region39: #{tree_memory_predictor_forward.1} parent=1 // pred_check_branch
      %81 = sbr.rel (0) target = $region41
    $region40: #{tree_memory_predictor_forward.1} parent=1 // pred_region
      _
    $region41: #{tree_memory_predictor_forward.1} parent=1 // pred_fallthru
      _
    // Predicated region
    $region42: #{tree_memory_predictor_forward.1} parent=1 // pred_check
      _
    $region43: #{tree_memory_predictor_forward.1} parent=1 // pred_check_branch
      %83 = sbr.rel (0) target = $region45
    $region44: #{tree_memory_predictor_forward.1} parent=1 // pred_region
      _
    $region45: #{tree_memory_predictor_forward.1} parent=1 // pred_fallthru
      _
    // Predicated region
    $region46: #{tree_memory_predictor_forward.1} parent=1 // pred_check
      _
    $region47: #{tree_memory_predictor_forward.1} parent=1 // pred_check_branch
      %85 = sbr.rel (0) target = $region49
    $region48: #{tree_memory_predictor_forward.1} parent=1 // pred_region
      %86 = dma.done [#allocation4], 128
    $region49: #{tree_memory_predictor_forward.1} parent=1 // pred_fallthru
      _
    // Predicated region
    $region50: #{tree_memory_predictor_forward.1} parent=1 // pred_check
      _
    $region51: #{tree_memory_predictor_forward.1} parent=1 // pred_check_branch
      %88 = sbr.rel (0) target = $region53
    $region52: #{tree_memory_predictor_forward.1} parent=1 // pred_region
      %89 = dma.done [#allocation7], 32
    $region53: #{tree_memory_predictor_forward.1} parent=1 // pred_fallthru
      _
    // Predicated region
    $region54: #{tree_memory_predictor_forward.1} parent=1 // pred_check
      _
    $region55: #{tree_memory_predictor_forward.1} parent=1 // pred_check_branch
      %91 = sbr.rel (0) target = $region57
    $region56: #{tree_memory_predictor_forward.1} parent=1 // pred_region
      %92 = dma.done [#allocation7], 16
    $region57: #{tree_memory_predictor_forward.1} parent=1 // pred_fallthru
      _
    // Predicated region
    $region58: #{tree_memory_predictor_forward.1} parent=1 // pred_check
      _
    $region59: #{tree_memory_predictor_forward.1} parent=1 // pred_check_branch
      %94 = sbr.rel (0) target = $region61
    $region60: #{tree_memory_predictor_forward.1} parent=1 // pred_region
      %95 = dma.done [#allocation10], 16
    $region61: #{tree_memory_predictor_forward.1} parent=1 // pred_fallthru
      _
    // Predicated region
    $region62: #{tree_memory_predictor_forward.1} parent=1 // pred_check
      _
    $region63: #{tree_memory_predictor_forward.1} parent=1 // pred_check_branch
      %97 = sbr.rel (0) target = $region65
    $region64: #{tree_memory_predictor_forward.1} parent=1 // pred_region
      %98 = dma.done [#allocation10], 16
    $region65: #{tree_memory_predictor_forward.1} parent=1 // pred_fallthru
      _
    %v100 = vld [vmem:[#allocation3] sm:$0xff]
    %v101 = vpack.c.bf16 %v100, %v100
    %v102 = vld [vmem:[%s1] sm:$0xff]
    %v103 = vld [vmem:[%s1 + $0x8] sm:$0xff]
    %v104 = vld [vmem:[#allocation6] sm:$0x3]
    %v106 = vlaneseq
    %v107 = vshrl.u32 %v106, 7
    %v108 = vsub.s32 0, %v107
    %v109 = vrot.slane %v104, %v108
    %v110 = vlaneseq
    %v111 = vshrl.u32 %v110, 7
    %v112 = vsub.s32 1, %v111
    %v113 = vrot.slane %v104, %v112
    %v118 = vunpack.c.l.b16 %v102
    %v119 = vunpack.c.h.b16 %v102
    %v120 = vunpack.c.l.b16 %v103
    %v121 = vunpack.c.h.b16 %v103
    %v122 = vpack.c.b16 %v120, %v118
    %v123 = vpack.c.b16 %v121, %v119
    %vm126 = vcmask 130048
    %v128 = vsel %vm126, %v101, 0
    %130 = vmatprep.subr.bf16.mxu0 0
    %131 = vmatpush1.bf16.msra.mxu0 0
    %132 = vmatprep.subr.bf16.mxu0 0
    %133 = vmatpush1.bf16.msra.mxu0 0
    %134 = vmatprep.subr.bf16.mxu0 0
    %135 = vmatpush1.bf16.msra.mxu0 0
    %136 = vmatprep.subr.bf16.mxu0 0
    %137 = vmatpush1.bf16.msra.mxu0 0
    %138 = vmatprep.subr.bf16.mxu0 0
    %139 = vmatpush1.bf16.msra.mxu0 0
    %140 = vmatprep.subr.bf16.mxu0 0
    %141 = vmatpush1.bf16.msra.mxu0 0
    %142 = vmatprep.subr.bf16.mxu0 0
    %143 = vmatpush1.bf16.msra.mxu0 0
    %144 = vmatprep.subr.bf16.mxu0 %v123
    %145 = vmatpush1.bf16.msra.mxu0 %v122
    %146 = vmatprep.subr.bf16.mxu0 0
    %147 = vmatpush2.bf16.msra.mxu0 0
    %148 = vmatprep.subr.bf16.mxu0 0
    %149 = vmatpush2.bf16.msra.mxu0 0
    %150 = vmatprep.subr.bf16.mxu0 0
    %151 = vmatpush2.bf16.msra.mxu0 0
    %152 = vmatprep.subr.bf16.mxu0 0
    %153 = vmatpush2.bf16.msra.mxu0 0
    %154 = vmatprep.subr.bf16.mxu0 0
    %155 = vmatpush2.bf16.msra.mxu0 0
    %156 = vmatprep.subr.bf16.mxu0 0
    %157 = vmatpush2.bf16.msra.mxu0 0
    %158 = vmatprep.subr.bf16.mxu0 0
    %159 = vmatpush2.bf16.msra.mxu0 0
    %160 = vmatprep.subr.bf16.mxu0 0
    %161 = vmatpush2.bf16.msra.mxu0 0
    %162 = vmatprep.mubr.bf16.mxu0 0
    %163 = vmatmul.mubr.bf16.gmra.mxu0 %v128
    %v164 = vpop.f32.mrf.mxu0
    %v165 = vadd.f32 %v109, %v164
    %v166 = vpop.f32.mrf.mxu0
    %v167 = vadd.f32 %v113, %v166
    %v168 = vpop.f32.mrf.mxu0
    %v169 = vpop.f32.mrf.mxu0
    %170 = vdwg.mxu0
    %v171 = vmax.f32 %v165, 0.0
    %v172 = vmax.f32 %v167, 0.0
    %v173 = vpack.c.bf16 %v171, %v171
    %v174 = vpack.c.bf16 %v172, %v172
    %v175 = vld [vmem:[%s3] sm:$0xf]
    %v176 = vld [vmem:[%s3 + $0x4] sm:$0xf]
    %v177 = vld [vmem:[%s3 + $0x8] sm:$0xf]
    %v178 = vld [vmem:[%s3 + $0xc] sm:$0xf]
    %v179 = vld [vmem:[%s3 + $0x10] sm:$0xf]
    %v180 = vld [vmem:[%s3 + $0x14] sm:$0xf]
    %v181 = vld [vmem:[%s3 + $0x18] sm:$0xf]
    %v182 = vld [vmem:[%s3 + $0x1c] sm:$0xf]
    %v183 = vld [vmem:[%s3 + $0x20] sm:$0xf]
    %v184 = vld [vmem:[%s3 + $0x24] sm:$0xf]
    %v185 = vld [vmem:[%s3 + $0x28] sm:$0xf]
    %v186 = vld [vmem:[%s3 + $0x2c] sm:$0xf]
    %v187 = vld [vmem:[%s3 + $0x30] sm:$0xf]
    %v188 = vld [vmem:[%s3 + $0x34] sm:$0xf]
    %v189 = vld [vmem:[%s3 + $0x38] sm:$0xf]
    %v190 = vld [vmem:[%s3 + $0x3c] sm:$0xf]
    %v191 = vld [vmem:[%s3 + $0x40] sm:$0xf]
    %v192 = vld [vmem:[%s3 + $0x44] sm:$0xf]
    %v193 = vld [vmem:[%s3 + $0x48] sm:$0xf]
    %v194 = vld [vmem:[%s3 + $0x4c] sm:$0xf]
    %v195 = vld [vmem:[%s3 + $0x50] sm:$0xf]
    %v196 = vld [vmem:[%s3 + $0x54] sm:$0xf]
    %v197 = vld [vmem:[%s3 + $0x58] sm:$0xf]
    %v198 = vld [vmem:[%s3 + $0x5c] sm:$0xf]
    %v199 = vld [vmem:[%s3 + $0x60] sm:$0xf]
    %v200 = vld [vmem:[%s3 + $0x64] sm:$0xf]
    %v201 = vld [vmem:[%s3 + $0x68] sm:$0xf]
    %v202 = vld [vmem:[%s3 + $0x6c] sm:$0xf]
    %v203 = vld [vmem:[%s3 + $0x70] sm:$0xf]
    %v204 = vld [vmem:[%s3 + $0x74] sm:$0xf]
    %v205 = vld [vmem:[%s3 + $0x78] sm:$0xf]
    %v206 = vld [vmem:[%s3 + $0x7c] sm:$0xf]
    %v207 = vld [vmem:[#allocation8] sm:$0x1]
    %v209 = vlaneseq
    %v210 = vshrl.u32 %v209, 7
    %v211 = vsub.s32 0, %v210
    %v212 = vrot.slane %v207, %v211
    %v246 = vunpack.c.l.b16 %v175
    %v247 = vunpack.c.l.b16 %v176
    %v248 = vunpack.c.l.b16 %v177
    %v249 = vunpack.c.l.b16 %v178
    %v250 = vunpack.c.l.b16 %v179
    %v251 = vunpack.c.l.b16 %v180
    %v252 = vunpack.c.l.b16 %v181
    %v253 = vunpack.c.l.b16 %v182
    %v254 = vunpack.c.l.b16 %v183
    %v255 = vunpack.c.l.b16 %v184
    %v256 = vunpack.c.l.b16 %v185
    %v257 = vunpack.c.l.b16 %v186
    %v258 = vunpack.c.l.b16 %v187
    %v259 = vunpack.c.l.b16 %v188
    %v260 = vunpack.c.l.b16 %v189
    %v261 = vunpack.c.l.b16 %v190
    %v262 = vunpack.c.l.b16 %v191
    %v263 = vunpack.c.l.b16 %v192
    %v264 = vunpack.c.l.b16 %v193
    %v265 = vunpack.c.l.b16 %v194
    %v266 = vunpack.c.l.b16 %v195
    %v267 = vunpack.c.l.b16 %v196
    %v268 = vunpack.c.l.b16 %v197
    %v269 = vunpack.c.l.b16 %v198
    %v270 = vunpack.c.l.b16 %v199
    %v271 = vunpack.c.l.b16 %v200
    %v272 = vunpack.c.l.b16 %v201
    %v273 = vunpack.c.l.b16 %v202
    %v274 = vunpack.c.l.b16 %v203
    %v275 = vunpack.c.l.b16 %v204
    %v276 = vunpack.c.l.b16 %v205
    %v277 = vunpack.c.l.b16 %v206
    %v278 = vpack.c.b16 %v247, %v246
    %v279 = vpack.c.b16 %v249, %v248
    %v280 = vpack.c.b16 %v251, %v250
    %v281 = vpack.c.b16 %v253, %v252
    %v282 = vpack.c.b16 %v255, %v254
    %v283 = vpack.c.b16 %v257, %v256
    %v284 = vpack.c.b16 %v259, %v258
    %v285 = vpack.c.b16 %v261, %v260
    %v286 = vpack.c.b16 %v263, %v262
    %v287 = vpack.c.b16 %v265, %v264
    %v288 = vpack.c.b16 %v267, %v266
    %v289 = vpack.c.b16 %v269, %v268
    %v290 = vpack.c.b16 %v271, %v270
    %v291 = vpack.c.b16 %v273, %v272
    %v292 = vpack.c.b16 %v275, %v274
    %v293 = vpack.c.b16 %v277, %v276
    %310 = vmatprep.subr.bf16.mxu0 0
    %311 = vmatpush1.bf16.msra.mxu0 %v285
    %312 = vmatprep.subr.bf16.mxu0 0
    %313 = vmatpush1.bf16.msra.mxu0 %v284
    %314 = vmatprep.subr.bf16.mxu0 0
    %315 = vmatpush1.bf16.msra.mxu0 %v283
    %316 = vmatprep.subr.bf16.mxu0 0
    %317 = vmatpush1.bf16.msra.mxu0 %v282
    %318 = vmatprep.subr.bf16.mxu0 0
    %319 = vmatpush1.bf16.msra.mxu0 %v281
    %320 = vmatprep.subr.bf16.mxu0 0
    %321 = vmatpush1.bf16.msra.mxu0 %v280
    %322 = vmatprep.subr.bf16.mxu0 0
    %323 = vmatpush1.bf16.msra.mxu0 %v279
    %324 = vmatprep.subr.bf16.mxu0 0
    %325 = vmatpush1.bf16.msra.mxu0 %v278
    %326 = vmatprep.subr.bf16.mxu0 0
    %327 = vmatpush2.bf16.msra.mxu0 %v293
    %328 = vmatprep.subr.bf16.mxu0 0
    %329 = vmatpush2.bf16.msra.mxu0 %v292
    %330 = vmatprep.subr.bf16.mxu0 0
    %331 = vmatpush2.bf16.msra.mxu0 %v291
    %332 = vmatprep.subr.bf16.mxu0 0
    %333 = vmatpush2.bf16.msra.mxu0 %v290
    %334 = vmatprep.subr.bf16.mxu0 0
    %335 = vmatpush2.bf16.msra.mxu0 %v289
    %336 = vmatprep.subr.bf16.mxu0 0
    %337 = vmatpush2.bf16.msra.mxu0 %v288
    %338 = vmatprep.subr.bf16.mxu0 0
    %339 = vmatpush2.bf16.msra.mxu0 %v287
    %340 = vmatprep.subr.bf16.mxu0 0
    %341 = vmatpush2.bf16.msra.mxu0 %v286
    %342 = vmatprep.mubr.bf16.mxu0 %v174
    %343 = vmatmul.mubr.bf16.gmra.mxu0 %v173
    %v344 = vpop.f32.mrf.mxu0
    %v345 = vadd.f32 %v212, %v344
    %v346 = vpop.f32.mrf.mxu0
    %v347 = vpop.f32.mrf.mxu0
    %v348 = vpop.f32.mrf.mxu0
    %349 = vdwg.mxu0
    %v350 = vmax.f32 %v345, 0.0
    %v351 = vpack.c.bf16 %v350, %v350
    %v352 = vld [vmem:[%s5] sm:$0xf]
    %v353 = vld [vmem:[%s5 + $0x4] sm:$0xf]
    %v354 = vld [vmem:[%s5 + $0x8] sm:$0xf]
    %v355 = vld [vmem:[%s5 + $0xc] sm:$0xf]
    %v356 = vld [vmem:[%s5 + $0x10] sm:$0xf]
    %v357 = vld [vmem:[%s5 + $0x14] sm:$0xf]
    %v358 = vld [vmem:[%s5 + $0x18] sm:$0xf]
    %v359 = vld [vmem:[%s5 + $0x1c] sm:$0xf]
    %v360 = vld [vmem:[%s5 + $0x20] sm:$0xf]
    %v361 = vld [vmem:[%s5 + $0x24] sm:$0xf]
    %v362 = vld [vmem:[%s5 + $0x28] sm:$0xf]
    %v363 = vld [vmem:[%s5 + $0x2c] sm:$0xf]
    %v364 = vld [vmem:[%s5 + $0x30] sm:$0xf]
    %v365 = vld [vmem:[%s5 + $0x34] sm:$0xf]
    %v366 = vld [vmem:[%s5 + $0x38] sm:$0xf]
    %v367 = vld [vmem:[%s5 + $0x3c] sm:$0xf]
    %v368 = vld [vmem:[#allocation9] sm:$0x1]
    %v370 = vlaneseq
    %v371 = vshrl.u32 %v370, 7
    %v372 = vsub.s32 0, %v371
    %v373 = vrot.slane %v368, %v372
    %v391 = vunpack.c.l.b16 %v352
    %v392 = vunpack.c.l.b16 %v353
    %v393 = vunpack.c.l.b16 %v354
    %v394 = vunpack.c.l.b16 %v355
    %v395 = vunpack.c.l.b16 %v356
    %v396 = vunpack.c.l.b16 %v357
    %v397 = vunpack.c.l.b16 %v358
    %v398 = vunpack.c.l.b16 %v359
    %v399 = vunpack.c.l.b16 %v360
    %v400 = vunpack.c.l.b16 %v361
    %v401 = vunpack.c.l.b16 %v362
    %v402 = vunpack.c.l.b16 %v363
    %v403 = vunpack.c.l.b16 %v364
    %v404 = vunpack.c.l.b16 %v365
    %v405 = vunpack.c.l.b16 %v366
    %v406 = vunpack.c.l.b16 %v367
    %v407 = vpack.c.b16 %v392, %v391
    %v408 = vpack.c.b16 %v394, %v393
    %v409 = vpack.c.b16 %v396, %v395
    %v410 = vpack.c.b16 %v398, %v397
    %v411 = vpack.c.b16 %v400, %v399
    %v412 = vpack.c.b16 %v402, %v401
    %v413 = vpack.c.b16 %v404, %v403
    %v414 = vpack.c.b16 %v406, %v405
    %423 = vmatprep.subr.bf16.mxu0 0
    %424 = vmatpush1.bf16.msra.mxu0 %v414
    %425 = vmatprep.subr.bf16.mxu0 0
    %426 = vmatpush1.bf16.msra.mxu0 %v413
    %427 = vmatprep.subr.bf16.mxu0 0
    %428 = vmatpush1.bf16.msra.mxu0 %v412
    %429 = vmatprep.subr.bf16.mxu0 0
    %430 = vmatpush1.bf16.msra.mxu0 %v411
    %431 = vmatprep.subr.bf16.mxu0 0
    %432 = vmatpush1.bf16.msra.mxu0 %v410
    %433 = vmatprep.subr.bf16.mxu0 0
    %434 = vmatpush1.bf16.msra.mxu0 %v409
    %435 = vmatprep.subr.bf16.mxu0 0
    %436 = vmatpush1.bf16.msra.mxu0 %v408
    %437 = vmatprep.subr.bf16.mxu0 0
    %438 = vmatpush1.bf16.msra.mxu0 %v407
    %439 = vmatprep.subr.bf16.mxu0 0
    %440 = vmatpush2.bf16.msra.mxu0 0
    %441 = vmatprep.subr.bf16.mxu0 0
    %442 = vmatpush2.bf16.msra.mxu0 0
    %443 = vmatprep.subr.bf16.mxu0 0
    %444 = vmatpush2.bf16.msra.mxu0 0
    %445 = vmatprep.subr.bf16.mxu0 0
    %446 = vmatpush2.bf16.msra.mxu0 0
    %447 = vmatprep.subr.bf16.mxu0 0
    %448 = vmatpush2.bf16.msra.mxu0 0
    %449 = vmatprep.subr.bf16.mxu0 0
    %450 = vmatpush2.bf16.msra.mxu0 0
    %451 = vmatprep.subr.bf16.mxu0 0
    %452 = vmatpush2.bf16.msra.mxu0 0
    %453 = vmatprep.subr.bf16.mxu0 0
    %454 = vmatpush2.bf16.msra.mxu0 0
    %455 = vmatprep.mubr.bf16.mxu0 0
    %456 = vmatmul.mubr.bf16.gmra.mxu0 %v351
    %v457 = vpop.f32.mrf.mxu0
    %v458 = vadd.f32 %v373, %v457
    %v459 = vpop.f32.mrf.mxu0
    %v460 = vpop.f32.mrf.mxu0
    %v461 = vpop.f32.mrf.mxu0
    %462 = vdwg.mxu0
    %v463 = vmax.f32 %v458, 0.0
    %v464 = vpack.c.bf16 %v463, %v463
    %v465 = vld [vmem:[%s7] sm:$0xf]
    %v466 = vld [vmem:[%s7 + $0x4] sm:$0xf]
    %v467 = vld [vmem:[%s7 + $0x8] sm:$0xf]
    %v468 = vld [vmem:[%s7 + $0xc] sm:$0xf]
    %v469 = vld [vmem:[%s7 + $0x10] sm:$0xf]
    %v470 = vld [vmem:[%s7 + $0x14] sm:$0xf]
    %v471 = vld [vmem:[%s7 + $0x18] sm:$0xf]
    %v472 = vld [vmem:[%s7 + $0x1c] sm:$0xf]
    %v473 = vld [vmem:[#allocation11] sm:$0x1]
    %v475 = vlaneseq
    %v476 = vshrl.u32 %v475, 7
    %v477 = vsub.s32 0, %v476
    %v478 = vrot.slane %v473, %v477
    %v488 = vunpack.c.l.b16 %v465
    %v489 = vunpack.c.l.b16 %v466
    %v490 = vunpack.c.l.b16 %v467
    %v491 = vunpack.c.l.b16 %v468
    %v492 = vunpack.c.l.b16 %v469
    %v493 = vunpack.c.l.b16 %v470
    %v494 = vunpack.c.l.b16 %v471
    %v495 = vunpack.c.l.b16 %v472
    %v496 = vpack.c.b16 %v489, %v488
    %v497 = vpack.c.b16 %v491, %v490
    %v498 = vpack.c.b16 %v493, %v492
    %v499 = vpack.c.b16 %v495, %v494
    %vm504 = vcmask 523264
    %v506 = vsel %vm504, %v464, 0
    %508 = vmatprep.subr.bf16.mxu0 0
    %509 = vmatpush1.bf16.msra.mxu0 0
    %510 = vmatprep.subr.bf16.mxu0 0
    %511 = vmatpush1.bf16.msra.mxu0 0
    %512 = vmatprep.subr.bf16.mxu0 0
    %513 = vmatpush1.bf16.msra.mxu0 0
    %514 = vmatprep.subr.bf16.mxu0 0
    %515 = vmatpush1.bf16.msra.mxu0 0
    %516 = vmatprep.subr.bf16.mxu0 0
    %517 = vmatpush1.bf16.msra.mxu0 %v499
    %518 = vmatprep.subr.bf16.mxu0 0
    %519 = vmatpush1.bf16.msra.mxu0 %v498
    %520 = vmatprep.subr.bf16.mxu0 0
    %521 = vmatpush1.bf16.msra.mxu0 %v497
    %522 = vmatprep.subr.bf16.mxu0 0
    %523 = vmatpush1.bf16.msra.mxu0 %v496
    %524 = vmatprep.subr.bf16.mxu0 0
    %525 = vmatpush2.bf16.msra.mxu0 0
    %526 = vmatprep.subr.bf16.mxu0 0
    %527 = vmatpush2.bf16.msra.mxu0 0
    %528 = vmatprep.subr.bf16.mxu0 0
    %529 = vmatpush2.bf16.msra.mxu0 0
    %530 = vmatprep.subr.bf16.mxu0 0
    %531 = vmatpush2.bf16.msra.mxu0 0
    %532 = vmatprep.subr.bf16.mxu0 0
    %533 = vmatpush2.bf16.msra.mxu0 0
    %534 = vmatprep.subr.bf16.mxu0 0
    %535 = vmatpush2.bf16.msra.mxu0 0
    %536 = vmatprep.subr.bf16.mxu0 0
    %537 = vmatpush2.bf16.msra.mxu0 0
    %538 = vmatprep.subr.bf16.mxu0 0
    %539 = vmatpush2.bf16.msra.mxu0 0
    %540 = vmatprep.mubr.bf16.mxu0 0
    %541 = vmatmul.mubr.bf16.gmra.mxu0 %v506
    %v542 = vpop.f32.mrf.mxu0
    %v543 = vadd.f32 %v478, %v542
    %v544 = vpop.f32.mrf.mxu0
    %v545 = vpop.f32.mrf.mxu0
    %v546 = vpop.f32.mrf.mxu0
    %547 = vdwg.mxu0
    %v548 = vmax.f32 %v543, 0.0
    %v549 = vld [vmem:[%s9] sm:$0x1]
    %v551 = vlaneseq
    %v552 = vshrl.u32 %v551, 7
    %v553 = vsub.s32 0, %v552
    %v554 = vrot.slane %v549, %v553
    %v556 = vmul.f32 %v548, %v554
    %vm557 = vcmask 261120
    %v558 = vsel %vm557, %v556, 0.0
    %559 = vadd.xlane.f32.xlu0 %v558
    %v560 = vpop.xlane.xlu0 %559
    %v561 = vld [vmem:[#allocation2] sm:$0x1]
    %563 = vset.pattern.permute.xlu0 0
    %564 = vperm.xlu0 %563, %v561
    %v565 = vpop.permute.xlu0 %564
    %v567 = vlaneseq
    %v568 = vshrl.u32 %v567, 7
    %v569 = vsub.s32 0, %v568
    %v570 = vrot.slane %v565, %v569
    %v571 = vadd.f32 %v560, %v570
    %v573 = vlaneseq
    %v574 = vand.u32 %v573, 127
    %v575 = vlaneseq
    %v576 = vshrl.u32 %v575, 7
    %v577 = vsub.s32 %v574, %v576
    %v578 = vrot.slane %v571, %v577
    %vm580 = vcmask 57344
    %581 = vst.msk [vmem:[#allocation12] sm:$0x1] %vm580, %v578
    // Predicated region
    $region66: #{tree_memory_predictor_forward.1} parent=1 // pred_check
      _
    $region67: #{tree_memory_predictor_forward.1} parent=1 // pred_check_branch
      %583 = sbr.rel (0) target = $region69
    $region68: #{tree_memory_predictor_forward.1} parent=1 // pred_region
      %s585 = ssub.s32 16, 16
      %586 = vsyncadd [#allocation5], %s585
      %s588 = sshll.u32 [#allocation12], 4
      %s589 = int_to_ptr.vmem [resolvable:$true] %s588
      %591 = dma.vmem_to_hbm [thread:$0]  %s589, 16, %s11, [#allocation5]
    $region69: #{tree_memory_predictor_forward.1} parent=1 // pred_fallthru
      _
    // Predicated region
    $region70: #{tree_memory_predictor_forward.1} parent=1 // pred_check
      _
    $region71: #{tree_memory_predictor_forward.1} parent=1 // pred_check_branch
      %593 = sbr.rel (0) target = $region73
    $region72: #{tree_memory_predictor_forward.1} parent=1 // pred_region
      %594 = dma.done [#allocation5], 16
    $region73: #{tree_memory_predictor_forward.1} parent=1 // pred_fallthru
      _
    %595 = vsyncpa [#allocation4], 1
    %596 = vsyncpa [#allocation7], 1
    %597 = vsyncpa [#allocation10], 1
    %598 = vsyncpa [#allocation5], 1

</llo_original>
